<compile_context>
chip_gen: v5e
topology: v5e:2x2
jax: 0.10.0
libtpu: 0.0.40
codegen_flags: <defaults>
</compile_context>

<pallas_src>
import functools

import jax
import jax.numpy as jnp
from jax.experimental import pallas as pl
from jax.experimental.pallas import tpu as pltpu


def _round_up(x, m):
    return ((x + m - 1) // m) * m


def _vmem_budget_bytes():
    """Returns (vmem_limit_bytes, tile_budget_bytes), per-TensorCore-safe everywhere."""
    cap = None
    try:
        cap = getattr(pltpu.get_tpu_info(), "vmem_capacity_bytes", None)
    except Exception:
        cap = None
    cap = int(cap) if cap else 64 * 1024 * 1024
    # get_tpu_info() may report per-chip VMEM; v7x has only 64 MiB per TensorCore, so
    # never assume more than 64 MiB is usable, and keep headroom for Mosaic internal
    # scratch plus the double-buffered constant (weight/bias) blocks.
    per_core = max(min(cap, 64 * 1024 * 1024), 32 * 1024 * 1024)
    vmem_limit = per_core - 8 * 1024 * 1024
    tile_budget = per_core - 16 * 1024 * 1024
    return vmem_limit, tile_budget


def _deconv_matmul_kernel(x_ref, w_ref, b_ref, o_ref, *, precision):
    # x_ref: (t_rows, Kin)  w_ref: (Kin, Kp)  b_ref: (1, Kp) [f32]  o_ref: (t_rows, Kp)
    acc = jnp.dot(x_ref[...], w_ref[...],
                  preferred_element_type=jnp.float32, precision=precision)
    o_ref[...] = (acc + b_ref[...]).astype(o_ref.dtype)


def deconv_block(x_nchw, weight, bias, *, use_bf16=True):
    """ConvTranspose2d(in_c, out_c, kernel_size=2, stride=2, padding=0).

    x_nchw : (N, in_c, H, W)
    weight : (in_c, out_c, 2, 2)   (PyTorch ConvTranspose2d weight layout)
    bias   : (out_c,)
    use_bf16: bf16 x / W / output (default; HBM-bound op) — accumulation stays f32.
              use_bf16=False gives strict float32 parity (Precision.HIGHEST).
    returns: (N, out_c, 2H, 2W) in NCHW, dtype bf16 (default) or x.dtype.
    """
    N, C, H, W = x_nchw.shape
    in_c, out_c, kh, kw = weight.shape
    assert C == in_c and (kh, kw) == (2, 2)

    compute_dtype = jnp.bfloat16 if use_bf16 else x_nchw.dtype
    precision = None if use_bf16 else jax.lax.Precision.HIGHEST

    R = N * H                     # matmul rows: one per (n, input row i)
    Kin = W * in_c                # contraction cols: (j, ic), block-diagonal over j
    Kp = kh * kw * W * out_c      # output cols: (ki, j, kj, oc) -> NHWC for free

    # --- LHS: cast FIRST (halves the wrapper transpose traffic), then NCHW -> NHWC.
    x_rows = jnp.transpose(x_nchw.astype(compute_dtype), (0, 2, 3, 1)).reshape(R, Kin)

    # --- weight: (in_c, out_c, ki, kj) -> (ki, in_c, kj*out_c), block-diag over j,
    # concatenated ki-major along columns so the kernel output is already NHWC-ordered.
    w_ki = jnp.transpose(weight, (2, 0, 3, 1)).reshape(kh, in_c, kw * out_c)
    eye_w = jnp.eye(W, dtype=weight.dtype)
    w_big = jnp.concatenate(
        [jnp.kron(eye_w, w_ki[k]) for k in range(kh)], axis=1
    ).astype(compute_dtype)                                         # (Kin, Kp)

    # Bias stays f32 and is added to the f32 accumulator inside the kernel.
    b_big = jnp.tile(bias.astype(jnp.float32), (kh * kw * W,)).reshape(1, Kp)

    # --- row-tile sizing with lane/sublane-padded VMEM accounting.
    vmem_limit, tile_budget = _vmem_budget_bytes()
    in_b = jnp.dtype(compute_dtype).itemsize
    sub = 16 if in_b == 2 else 8
    kin_pad = _round_up(Kin, 128)
    kp_pad = _round_up(Kp, 128)
    const_bytes = 2 * (kin_pad * kp_pad * in_b + kp_pad * 4)        # double-buffered W + bias
    per_row = 2 * (kin_pad * in_b + kp_pad * in_b)                  # double-buffered x + y rows
    avail = max(tile_budget - const_bytes, 1 << 22)
    t_rows = min(avail // per_row, 8192)
    if R >= 2048:
        # keep >= ~8 grid steps so both v7x TensorCores and the DMA pipeline stay busy
        t_rows = min(t_rows, max(512, -(-R // 8)))
    t_rows = min(t_rows, _round_up(R, sub))
    t_rows = max(sub, (t_rows // sub) * sub)

    grid_m = -(-R // t_rows)
    r_pad = grid_m * t_rows
    if r_pad > R:
        x_rows = jnp.pad(x_rows, ((0, r_pad - R), (0, 0)))

    kernel = functools.partial(_deconv_matmul_kernel, precision=precision)

    # TODO(synk): for large W add a j-tile grid axis (block-diag only within the tile) so
    # the weight stays O(tile) and MXU waste bounded; for in_c in the hundreds add a K grid
    # axis with an f32 VMEM accumulator (pl.when init/finalize) and single-buffer the
    # constant weight/bias blocks via pipeline_mode=pl.Buffered(1).
    y = pl.pallas_call(
        kernel,
        out_shape=jax.ShapeDtypeStruct((r_pad, Kp), compute_dtype),
        grid_spec=pltpu.PrefetchScalarGridSpec(
            num_scalar_prefetch=0,
            grid=(grid_m,),
            in_specs=[
                pl.BlockSpec((t_rows, Kin), lambda i: (i, 0)),
                pl.BlockSpec((Kin, Kp), lambda i: (0, 0)),
                pl.BlockSpec((1, Kp), lambda i: (0, 0)),
            ],
            out_specs=pl.BlockSpec((t_rows, Kp), lambda i: (i, 0)),
        ),
        compiler_params=pltpu.CompilerParams(
            dimension_semantics=("parallel",),
            vmem_limit_bytes=int(vmem_limit),
        ),
    )(x_rows, w_big, b_big)

    # (R, (ki, j, kj, oc)) -> NHWC (N, 2H, 2W, oc) is a free row-major reshape; only the
    # module's NCHW boundary costs one transpose pass (drop it if NHWC output is acceptable).
    y_nhwc = y[:R].reshape(N, kh * H, kw * W, out_c)
    return jnp.transpose(y_nhwc, (0, 3, 1, 2))


def _deconv_reference(x_nchw, weight, bias):
    # pure-JAX reference of ConvTranspose2d(k=2, s=2, p=0), strict f32
    N, C, H, W = x_nchw.shape
    out_c = weight.shape[1]
    y = jnp.einsum("nchw,codk->nohdwk", x_nchw, weight,
                   precision=jax.lax.Precision.HIGHEST)     # (N, oc, H, ki, W, kj)
    y = y.reshape(N, out_c, 2 * H, 2 * W)
    return y + bias[None, :, None, None]


if __name__ == "__main__":
    key = jax.random.PRNGKey(0)
    k_x, k_w, k_b = jax.random.split(key, 3)

    N, in_c, H, W = 2, 4, 16, 16
    out_c = 8

    x = jax.random.normal(k_x, (N, in_c, H, W), dtype=jnp.float32)
    weight = jax.random.normal(k_w, (in_c, out_c, 2, 2), dtype=jnp.float32) * 0.1
    bias = jax.random.normal(k_b, (out_c,), dtype=jnp.float32) * 0.1

    y_ref = _deconv_reference(x, weight, bias)

    # strict f32 path (Precision.HIGHEST in-kernel): matches the PyTorch module numerics.
    y_f32 = jax.block_until_ready(deconv_block(x, weight, bias, use_bf16=False))
    assert y_f32.shape == (N, out_c, 2 * H, 2 * W)
    assert jnp.allclose(y_f32, y_ref, atol=1e-5, rtol=1e-5)

    # default bf16 hot path (halves HBM traffic on this write-dominated op).
    y_bf16 = jax.block_until_ready(deconv_block(x, weight, bias))
    assert y_bf16.shape == (N, out_c, 2 * H, 2 * W)
    assert y_bf16.dtype == jnp.bfloat16
    assert jnp.allclose(y_bf16.astype(jnp.float32), y_ref, atol=5e-2, rtol=5e-2)

    print("KERNEL_OK")
</pallas_src>

<mosaic_0001>
module attributes {stable_mosaic.version = 11 : i64} {
  func.func @_deconv_matmul_kernel(%arg0: i32, %arg1: memref<32x64xf32, #tpu.memory_space<vmem>>, %arg2: memref<64x512xf32, #tpu.memory_space<vmem>>, %arg3: memref<1x512xf32, #tpu.memory_space<vmem>>, %arg4: memref<32x512xf32, #tpu.memory_space<vmem>>) attributes {dimension_semantics = [#tpu.dimension_semantics<parallel>], iteration_bounds = array<i64: 1>, scalar_prefetch = 0 : i64, scratch_operands = 0 : i64, tpu.core_type = #tpu.core_type<tc>, window_params = [{transform_indices = @transform_0, window_bounds = array<i64: 32, 64>}, {pipeline_mode = #tpu.pipeline_mode<synchronous>, transform_indices = @transform_1, window_bounds = array<i64: 64, 512>}, {pipeline_mode = #tpu.pipeline_mode<synchronous>, transform_indices = @transform_2, window_bounds = array<i64: 1, 512>}, {transform_indices = @transform_3, window_bounds = array<i64: 32, 512>}]} {
    %c0 = arith.constant 0 : index
    %c0_0 = arith.constant 0 : index
    %0 = vector.load %arg1[%c0, %c0_0] : memref<32x64xf32, #tpu.memory_space<vmem>>, vector<32x64xf32>
    %c0_1 = arith.constant 0 : index
    %c0_2 = arith.constant 0 : index
    %1 = vector.load %arg2[%c0_1, %c0_2] : memref<64x512xf32, #tpu.memory_space<vmem>>, vector<64x512xf32>
    %cst = arith.constant dense<0.000000e+00> : vector<32x512xf32>
    %2 = tpu.matmul %0, %1, %cst {dimension_numbers = #tpu.dot_dimension_numbers<[1], [0], [0], [1], [0, 0, 1, 1], [], []>, precision = #tpu.contract_precision<fp32>} : vector<32x64xf32>, vector<64x512xf32>, vector<32x512xf32> -> vector<32x512xf32>
    %c0_3 = arith.constant 0 : index
    %c0_4 = arith.constant 0 : index
    %3 = vector.load %arg3[%c0_3, %c0_4] : memref<1x512xf32, #tpu.memory_space<vmem>>, vector<1x512xf32>
    %4 = vector.broadcast %3 : vector<1x512xf32> to vector<32x512xf32>
    %5 = arith.addf %2, %4 : vector<32x512xf32>
    %c0_5 = arith.constant 0 : index
    %c0_6 = arith.constant 0 : index
    %6 = vector.load %arg4[%c0_5, %c0_6] : memref<32x512xf32, #tpu.memory_space<vmem>>, vector<32x512xf32>
    tpu.vector_store %arg4[%c0_5, %c0_6], %5 {strides = array<i32>} : memref<32x512xf32, #tpu.memory_space<vmem>>, vector<32x512xf32>,
    return
  }
  func.func @transform_0(%arg0: i32) -> (i32, i32) {
    %c0_i32 = arith.constant 0 : i32
    %c0_i32_0 = arith.constant 0 : i32
    return %arg0, %c0_i32 : i32, i32
  }
  func.func @transform_1(%arg0: i32) -> (i32, i32) {
    %c0_i32 = arith.constant 0 : i32
    %c0_i32_0 = arith.constant 0 : i32
    %c0_i32_1 = arith.constant 0 : i32
    return %c0_i32, %c0_i32_0 : i32, i32
  }
  func.func @transform_2(%arg0: i32) -> (i32, i32) {
    %c0_i32 = arith.constant 0 : i32
    %c0_i32_0 = arith.constant 0 : i32
    %c0_i32_1 = arith.constant 0 : i32
    return %c0_i32, %c0_i32_0 : i32, i32
  }
  func.func @transform_3(%arg0: i32) -> (i32, i32) {
    %c0_i32 = arith.constant 0 : i32
    %c0_i32_0 = arith.constant 0 : i32
    return %arg0, %c0_i32 : i32, i32
  }
}

</mosaic_0001>

<llo_original>
// kernel: tpu_custom_call.1
$region0: #{tpu_custom_call.1}
  #allocation0 [shape = 'u32[]', space=smem, size = 0x4, offset = 0x4, fixed_abs, tag = 'smem constant byte address 0x4 - core index']
  #allocation1 [shape = 'u32[72,128]{1,0:T(1,128)}', space=vmem, size = 0x9000, scoped, tag = 'internal scratch']
  %s0 = inlined_call_operand.hbm [shape: f32[32,64], index: 0, kind: input, shape index: {}]
  %s1 = inlined_call_operand.hbm [shape: f32[64,512], index: 1, kind: input, shape index: {}]
  %s2 = inlined_call_operand.hbm [shape: f32[1,512], index: 2, kind: input, shape index: {}]
  %s3 = inlined_call_operand.hbm [shape: f32[32,512], index: 3, kind: output, shape index: {}]
  %s4 = sld [smem:[#allocation0]]
  $region34: #{tpu_custom_call.1} parent=0
    _
  %s6 = ssub.s32 1, %s4
  %s7 = scalar_select 0, %s6, %s4
  $region1: #{tpu_custom_call.1} parent=0
    #allocation2 [shape = 'u8[16384]{0}', space=vmem, size = 0x4000, scoped, tag = 'input window, operand 0, single buffered']
    #allocation3 [shape = 's32[1]{0}', space=sflag, size = 0x4, scoped, tag = 'scoped memory for tpu_custom_call.1']
    #allocation4 [shape = 's32[1]{0}', space=sflag, size = 0x4, scoped, tag = 'scoped memory for tpu_custom_call.1']
    #allocation5 [shape = 'u8[131072]{0}', space=vmem, size = 0x20000, scoped, tag = 'input window, operand 1, single buffered']
    #allocation6 [shape = 's32[1]{0}', space=sflag, size = 0x4, scoped, tag = 'scoped memory for tpu_custom_call.1']
    #allocation7 [shape = 'u8[2048]{0}', space=vmem, size = 0x800, scoped, tag = 'input window, operand 2, single buffered']
    #allocation8 [shape = 'u8[65536]{0}', space=vmem, size = 0x10000, scoped, tag = 'output window, operand 0, single buffered']
    %8 = vsyncpa [#allocation3], 0
    %9 = vsyncpa [#allocation6], 0
    %10 = vsyncpa [#allocation4], 0
    // Predicated region
    $region2: #{tpu_custom_call.1} parent=1 // pred_check
      _
    $region3: #{tpu_custom_call.1} parent=1 // pred_check_branch
      %12 = sbr.rel (0) target = $region5
    $region4: #{tpu_custom_call.1} parent=1 // pred_region
      %14 = vsyncadd [#allocation3], 0
      %s15 = sshll.u32 %s0, 4
      %s16 = int_to_ptr.hbm [resolvable:$true] %s15
      %s17 = sshll.u32 [#allocation2], 4
      %s18 = int_to_ptr.vmem [resolvable:$true] %s17
      %23 = dma.hbm_to_vmem [thread:$0]  %s16, 512, %s18, [#allocation3], 128, 128, 8
    $region5: #{tpu_custom_call.1} parent=1 // pred_fallthru
      _
    // Predicated region
    $region6: #{tpu_custom_call.1} parent=1 // pred_check
      _
    $region7: #{tpu_custom_call.1} parent=1 // pred_check_branch
      %25 = sbr.rel (0) target = $region9
    $region8: #{tpu_custom_call.1} parent=1 // pred_region
      %27 = vsyncadd [#allocation6], 0
      %s28 = sshll.u32 %s1, 4
      %s29 = int_to_ptr.hbm [resolvable:$true] %s28
      %s30 = sshll.u32 [#allocation5], 4
      %s31 = int_to_ptr.vmem [resolvable:$true] %s30
      %36 = dma.hbm_to_vmem [thread:$0]  %s29, 4096, %s31, [#allocation6], 512, 512, 32
    $region9: #{tpu_custom_call.1} parent=1 // pred_fallthru
      _
    // Predicated region
    $region10: #{tpu_custom_call.1} parent=1 // pred_check
      _
    $region11: #{tpu_custom_call.1} parent=1 // pred_check_branch
      %38 = sbr.rel (0) target = $region13
    $region12: #{tpu_custom_call.1} parent=1 // pred_region
      %40 = vsyncadd [#allocation6], 0
      %s42 = sshll.u32 %s2, 4
      %s43 = int_to_ptr.hbm [resolvable:$true] %s42
      %s44 = sshll.u32 [#allocation7], 4
      %s45 = int_to_ptr.vmem [resolvable:$true] %s44
      %47 = dma.hbm_to_vmem [thread:$0]  %s43, 64, %s45, [#allocation6]
    $region13: #{tpu_custom_call.1} parent=1 // pred_fallthru
      _
    // Predicated region
    $region14: #{tpu_custom_call.1} parent=1 // pred_check
      _
    $region15: #{tpu_custom_call.1} parent=1 // pred_check_branch
      %49 = sbr.rel (0) target = $region17
    $region16: #{tpu_custom_call.1} parent=1 // pred_region
      %51 = dma.done [#allocation3], 512
    $region17: #{tpu_custom_call.1} parent=1 // pred_fallthru
      _
    // Predicated region
    $region18: #{tpu_custom_call.1} parent=1 // pred_check
      _
    $region19: #{tpu_custom_call.1} parent=1 // pred_check_branch
      %53 = sbr.rel (0) target = $region21
    $region20: #{tpu_custom_call.1} parent=1 // pred_region
      %55 = dma.done [#allocation6], 4096
    $region21: #{tpu_custom_call.1} parent=1 // pred_fallthru
      _
    // Predicated region
    $region22: #{tpu_custom_call.1} parent=1 // pred_check
      _
    $region23: #{tpu_custom_call.1} parent=1 // pred_check_branch
      %57 = sbr.rel (0) target = $region25
    $region24: #{tpu_custom_call.1} parent=1 // pred_region
      %59 = dma.done [#allocation6], 64
    $region25: #{tpu_custom_call.1} parent=1 // pred_fallthru
      _
    %v60 = vld [vmem:[#allocation2] sm:$0xff]
    %v61 = vld [vmem:[#allocation2 + $0x8] sm:$0xff]
    %v62 = vld [vmem:[#allocation2 + $0x10] sm:$0xff]
    %v63 = vld [vmem:[#allocation2 + $0x18] sm:$0xff]
    %v64 = vld [vmem:[#allocation5] sm:$0xff]
    %v65 = vld [vmem:[#allocation5 + $0x8] sm:$0xff]
    %v66 = vld [vmem:[#allocation5 + $0x10] sm:$0xff]
    %v67 = vld [vmem:[#allocation5 + $0x18] sm:$0xff]
    %v68 = vld [vmem:[#allocation5 + $0x20] sm:$0xff]
    %v69 = vld [vmem:[#allocation5 + $0x28] sm:$0xff]
    %v70 = vld [vmem:[#allocation5 + $0x30] sm:$0xff]
    %v71 = vld [vmem:[#allocation5 + $0x38] sm:$0xff]
    %v72 = vld [vmem:[#allocation5 + $0x40] sm:$0xff]
    %v73 = vld [vmem:[#allocation5 + $0x48] sm:$0xff]
    %v74 = vld [vmem:[#allocation5 + $0x50] sm:$0xff]
    %v75 = vld [vmem:[#allocation5 + $0x58] sm:$0xff]
    %v76 = vld [vmem:[#allocation5 + $0x60] sm:$0xff]
    %v77 = vld [vmem:[#allocation5 + $0x68] sm:$0xff]
    %v78 = vld [vmem:[#allocation5 + $0x70] sm:$0xff]
    %v79 = vld [vmem:[#allocation5 + $0x78] sm:$0xff]
    %v80 = vld [vmem:[#allocation5 + $0x80] sm:$0xff]
    %v81 = vld [vmem:[#allocation5 + $0x88] sm:$0xff]
    %v82 = vld [vmem:[#allocation5 + $0x90] sm:$0xff]
    %v83 = vld [vmem:[#allocation5 + $0x98] sm:$0xff]
    %v84 = vld [vmem:[#allocation5 + $0xa0] sm:$0xff]
    %v85 = vld [vmem:[#allocation5 + $0xa8] sm:$0xff]
    %v86 = vld [vmem:[#allocation5 + $0xb0] sm:$0xff]
    %v87 = vld [vmem:[#allocation5 + $0xb8] sm:$0xff]
    %v88 = vld [vmem:[#allocation5 + $0xc0] sm:$0xff]
    %v89 = vld [vmem:[#allocation5 + $0xc8] sm:$0xff]
    %v90 = vld [vmem:[#allocation5 + $0xd0] sm:$0xff]
    %v91 = vld [vmem:[#allocation5 + $0xd8] sm:$0xff]
    %v92 = vld [vmem:[#allocation5 + $0xe0] sm:$0xff]
    %v93 = vld [vmem:[#allocation5 + $0xe8] sm:$0xff]
    %v94 = vld [vmem:[#allocation5 + $0xf0] sm:$0xff]
    %v95 = vld [vmem:[#allocation5 + $0xf8] sm:$0xff]
    %v96 = vld [vmem:[#allocation7] sm:$0xf]
    %v98 = vperm.slane %v96, 0
    %v99 = vperm.slane %v96, 1
    %v100 = vperm.slane %v96, 2
    %v101 = vperm.slane %v96, 3
    %vm106 = vcmask 523264
    %v108 = vsel %vm106, %v60, 0
    %v111 = vsel %vm106, %v61, 0
    %v114 = vsel %vm106, %v62, 0
    %v117 = vsel %vm106, %v63, 0
    %119 = vmatpush.msra.mxu0 0.0
    %120 = vmatpush.msra.mxu0 0.0
    %121 = vmatpush.msra.mxu0 0.0
    %122 = vmatpush.msra.mxu0 0.0
    %123 = vmatpush.msra.mxu0 0.0
    %124 = vmatpush.msra.mxu0 0.0
    %125 = vmatpush.msra.mxu0 0.0
    %126 = vmatpush.msra.mxu0 0.0
    %v127 = vand.u32 %v92, 4294901760
    %128 = vmatpush.msra.mxu0 %v127
    %v129 = vand.u32 %v88, 4294901760
    %130 = vmatpush.msra.mxu0 %v129
    %v131 = vand.u32 %v84, 4294901760
    %132 = vmatpush.msra.mxu0 %v131
    %v133 = vand.u32 %v80, 4294901760
    %134 = vmatpush.msra.mxu0 %v133
    %v135 = vand.u32 %v76, 4294901760
    %136 = vmatpush.msra.mxu0 %v135
    %v137 = vand.u32 %v72, 4294901760
    %138 = vmatpush.msra.mxu0 %v137
    %v139 = vand.u32 %v68, 4294901760
    %140 = vmatpush.msra.mxu0 %v139
    %v141 = vand.u32 %v64, 4294901760
    %142 = vmatpush.msra.mxu0 %v141
    %v143 = vand.u32 %v108, 4294901760
    %v144 = vsub.f32 %v108, %v143
    %v145 = vand.u32 %v144, 4294901760
    %v146 = vsub.f32 %v144, %v145
    %v147 = vand.u32 %v146, 4294901760
    %148 = vmatmul.f32.gmra.mxu0 %v147
    %v149 = vpop.f32.mrf.mxu0
    %v150 = vadd.f32 %v98, %v149
    %v151 = vand.u32 %v111, 4294901760
    %v152 = vsub.f32 %v111, %v151
    %v153 = vand.u32 %v152, 4294901760
    %v154 = vsub.f32 %v152, %v153
    %v155 = vand.u32 %v154, 4294901760
    %156 = vmatmul.f32.gmra.mxu0 %v155
    %v157 = vpop.f32.mrf.mxu0
    %v158 = vadd.f32 %v98, %v157
    %v159 = vand.u32 %v114, 4294901760
    %v160 = vsub.f32 %v114, %v159
    %v161 = vand.u32 %v160, 4294901760
    %v162 = vsub.f32 %v160, %v161
    %v163 = vand.u32 %v162, 4294901760
    %164 = vmatmul.f32.gmra.mxu0 %v163
    %v165 = vpop.f32.mrf.mxu0
    %v166 = vadd.f32 %v98, %v165
    %v167 = vand.u32 %v117, 4294901760
    %v168 = vsub.f32 %v117, %v167
    %v169 = vand.u32 %v168, 4294901760
    %v170 = vsub.f32 %v168, %v169
    %v171 = vand.u32 %v170, 4294901760
    %172 = vmatmul.f32.gmra.mxu0 %v171
    %v173 = vpop.f32.mrf.mxu0
    %v174 = vadd.f32 %v98, %v173
    %175 = vdwg.mxu0
    %176 = vmatpush.msra.mxu0 0.0
    %177 = vmatpush.msra.mxu0 0.0
    %178 = vmatpush.msra.mxu0 0.0
    %179 = vmatpush.msra.mxu0 0.0
    %180 = vmatpush.msra.mxu0 0.0
    %181 = vmatpush.msra.mxu0 0.0
    %182 = vmatpush.msra.mxu0 0.0
    %183 = vmatpush.msra.mxu0 0.0
    %v184 = vand.u32 %v92, 4294901760
    %v185 = vsub.f32 %v92, %v184
    %v186 = vand.u32 %v185, 4294901760
    %v187 = vsub.f32 %v185, %v186
    %v188 = vand.u32 %v187, 4294901760
    %189 = vmatpush.msra.mxu0 %v188
    %v190 = vand.u32 %v88, 4294901760
    %v191 = vsub.f32 %v88, %v190
    %v192 = vand.u32 %v191, 4294901760
    %v193 = vsub.f32 %v191, %v192
    %v194 = vand.u32 %v193, 4294901760
    %195 = vmatpush.msra.mxu0 %v194
    %v196 = vand.u32 %v84, 4294901760
    %v197 = vsub.f32 %v84, %v196
    %v198 = vand.u32 %v197, 4294901760
    %v199 = vsub.f32 %v197, %v198
    %v200 = vand.u32 %v199, 4294901760
    %201 = vmatpush.msra.mxu0 %v200
    %v202 = vand.u32 %v80, 4294901760
    %v203 = vsub.f32 %v80, %v202
    %v204 = vand.u32 %v203, 4294901760
    %v205 = vsub.f32 %v203, %v204
    %v206 = vand.u32 %v205, 4294901760
    %207 = vmatpush.msra.mxu0 %v206
    %v208 = vand.u32 %v76, 4294901760
    %v209 = vsub.f32 %v76, %v208
    %v210 = vand.u32 %v209, 4294901760
    %v211 = vsub.f32 %v209, %v210
    %v212 = vand.u32 %v211, 4294901760
    %213 = vmatpush.msra.mxu0 %v212
    %v214 = vand.u32 %v72, 4294901760
    %v215 = vsub.f32 %v72, %v214
    %v216 = vand.u32 %v215, 4294901760
    %v217 = vsub.f32 %v215, %v216
    %v218 = vand.u32 %v217, 4294901760
    %219 = vmatpush.msra.mxu0 %v218
    %v220 = vand.u32 %v68, 4294901760
    %v221 = vsub.f32 %v68, %v220
    %v222 = vand.u32 %v221, 4294901760
    %v223 = vsub.f32 %v221, %v222
    %v224 = vand.u32 %v223, 4294901760
    %225 = vmatpush.msra.mxu0 %v224
    %v226 = vand.u32 %v64, 4294901760
    %v227 = vsub.f32 %v64, %v226
    %v228 = vand.u32 %v227, 4294901760
    %v229 = vsub.f32 %v227, %v228
    %v230 = vand.u32 %v229, 4294901760
    %231 = vmatpush.msra.mxu0 %v230
    %v232 = vand.u32 %v108, 4294901760
    %233 = vmatmul.f32.gmra.mxu0 %v232
    %v234 = vpop.f32.mrf.mxu0
    %v235 = vadd.f32 %v150, %v234
    %v236 = vand.u32 %v111, 4294901760
    %237 = vmatmul.f32.gmra.mxu0 %v236
    %v238 = vpop.f32.mrf.mxu0
    %v239 = vadd.f32 %v158, %v238
    %v240 = vand.u32 %v114, 4294901760
    %241 = vmatmul.f32.gmra.mxu0 %v240
    %v242 = vpop.f32.mrf.mxu0
    %v243 = vadd.f32 %v166, %v242
    %v244 = vand.u32 %v117, 4294901760
    %245 = vmatmul.f32.gmra.mxu0 %v244
    %v246 = vpop.f32.mrf.mxu0
    %v247 = vadd.f32 %v174, %v246
    %248 = vdwg.mxu0
    %249 = vmatpush.msra.mxu0 0.0
    %250 = vmatpush.msra.mxu0 0.0
    %251 = vmatpush.msra.mxu0 0.0
    %252 = vmatpush.msra.mxu0 0.0
    %253 = vmatpush.msra.mxu0 0.0
    %254 = vmatpush.msra.mxu0 0.0
    %255 = vmatpush.msra.mxu0 0.0
    %256 = vmatpush.msra.mxu0 0.0
    %v257 = vand.u32 %v92, 4294901760
    %v258 = vsub.f32 %v92, %v257
    %259 = vmatpush.msra.mxu0 %v258
    %v260 = vand.u32 %v88, 4294901760
    %v261 = vsub.f32 %v88, %v260
    %262 = vmatpush.msra.mxu0 %v261
    %v263 = vand.u32 %v84, 4294901760
    %v264 = vsub.f32 %v84, %v263
    %265 = vmatpush.msra.mxu0 %v264
    %v266 = vand.u32 %v80, 4294901760
    %v267 = vsub.f32 %v80, %v266
    %268 = vmatpush.msra.mxu0 %v267
    %v269 = vand.u32 %v76, 4294901760
    %v270 = vsub.f32 %v76, %v269
    %271 = vmatpush.msra.mxu0 %v270
    %v272 = vand.u32 %v72, 4294901760
    %v273 = vsub.f32 %v72, %v272
    %274 = vmatpush.msra.mxu0 %v273
    %v275 = vand.u32 %v68, 4294901760
    %v276 = vsub.f32 %v68, %v275
    %277 = vmatpush.msra.mxu0 %v276
    %v278 = vand.u32 %v64, 4294901760
    %v279 = vsub.f32 %v64, %v278
    %280 = vmatpush.msra.mxu0 %v279
    %v281 = vand.u32 %v108, 4294901760
    %v282 = vsub.f32 %v108, %v281
    %283 = vmatmul.f32.gmra.mxu0 %v282
    %v284 = vpop.f32.mrf.mxu0
    %v285 = vadd.f32 %v235, %v284
    %v286 = vand.u32 %v111, 4294901760
    %v287 = vsub.f32 %v111, %v286
    %288 = vmatmul.f32.gmra.mxu0 %v287
    %v289 = vpop.f32.mrf.mxu0
    %v290 = vadd.f32 %v239, %v289
    %v291 = vand.u32 %v114, 4294901760
    %v292 = vsub.f32 %v114, %v291
    %293 = vmatmul.f32.gmra.mxu0 %v292
    %v294 = vpop.f32.mrf.mxu0
    %v295 = vadd.f32 %v243, %v294
    %v296 = vand.u32 %v117, 4294901760
    %v297 = vsub.f32 %v117, %v296
    %298 = vmatmul.f32.gmra.mxu0 %v297
    %v299 = vpop.f32.mrf.mxu0
    %v300 = vadd.f32 %v247, %v299
    %301 = vdwg.mxu0
    %302 = vmatpush.msra.mxu0 0.0
    %303 = vmatpush.msra.mxu0 0.0
    %304 = vmatpush.msra.mxu0 0.0
    %305 = vmatpush.msra.mxu0 0.0
    %306 = vmatpush.msra.mxu0 0.0
    %307 = vmatpush.msra.mxu0 0.0
    %308 = vmatpush.msra.mxu0 0.0
    %309 = vmatpush.msra.mxu0 0.0
    %v310 = vand.u32 %v92, 4294901760
    %311 = vmatpush.msra.mxu0 %v310
    %v312 = vand.u32 %v88, 4294901760
    %313 = vmatpush.msra.mxu0 %v312
    %v314 = vand.u32 %v84, 4294901760
    %315 = vmatpush.msra.mxu0 %v314
    %v316 = vand.u32 %v80, 4294901760
    %317 = vmatpush.msra.mxu0 %v316
    %v318 = vand.u32 %v76, 4294901760
    %319 = vmatpush.msra.mxu0 %v318
    %v320 = vand.u32 %v72, 4294901760
    %321 = vmatpush.msra.mxu0 %v320
    %v322 = vand.u32 %v68, 4294901760
    %323 = vmatpush.msra.mxu0 %v322
    %v324 = vand.u32 %v64, 4294901760
    %325 = vmatpush.msra.mxu0 %v324
    %v326 = vand.u32 %v108, 4294901760
    %v327 = vsub.f32 %v108, %v326
    %v328 = vand.u32 %v327, 4294901760
    %329 = vmatmul.f32.gmra.mxu0 %v328
    %v330 = vpop.f32.mrf.mxu0
    %v331 = vadd.f32 %v285, %v330
    %v332 = vand.u32 %v111, 4294901760
    %v333 = vsub.f32 %v111, %v332
    %v334 = vand.u32 %v333, 4294901760
    %335 = vmatmul.f32.gmra.mxu0 %v334
    %v336 = vpop.f32.mrf.mxu0
    %v337 = vadd.f32 %v290, %v336
    %v338 = vand.u32 %v114, 4294901760
    %v339 = vsub.f32 %v114, %v338
    %v340 = vand.u32 %v339, 4294901760
    %341 = vmatmul.f32.gmra.mxu0 %v340
    %v342 = vpop.f32.mrf.mxu0
    %v343 = vadd.f32 %v295, %v342
    %v344 = vand.u32 %v117, 4294901760
    %v345 = vsub.f32 %v117, %v344
    %v346 = vand.u32 %v345, 4294901760
    %347 = vmatmul.f32.gmra.mxu0 %v346
    %v348 = vpop.f32.mrf.mxu0
    %v349 = vadd.f32 %v300, %v348
    %350 = vdwg.mxu0
    %351 = vmatpush.msra.mxu0 0.0
    %352 = vmatpush.msra.mxu0 0.0
    %353 = vmatpush.msra.mxu0 0.0
    %354 = vmatpush.msra.mxu0 0.0
    %355 = vmatpush.msra.mxu0 0.0
    %356 = vmatpush.msra.mxu0 0.0
    %357 = vmatpush.msra.mxu0 0.0
    %358 = vmatpush.msra.mxu0 0.0
    %v359 = vand.u32 %v92, 4294901760
    %v360 = vsub.f32 %v92, %v359
    %v361 = vand.u32 %v360, 4294901760
    %362 = vmatpush.msra.mxu0 %v361
    %v363 = vand.u32 %v88, 4294901760
    %v364 = vsub.f32 %v88, %v363
    %v365 = vand.u32 %v364, 4294901760
    %366 = vmatpush.msra.mxu0 %v365
    %v367 = vand.u32 %v84, 4294901760
    %v368 = vsub.f32 %v84, %v367
    %v369 = vand.u32 %v368, 4294901760
    %370 = vmatpush.msra.mxu0 %v369
    %v371 = vand.u32 %v80, 4294901760
    %v372 = vsub.f32 %v80, %v371
    %v373 = vand.u32 %v372, 4294901760
    %374 = vmatpush.msra.mxu0 %v373
    %v375 = vand.u32 %v76, 4294901760
    %v376 = vsub.f32 %v76, %v375
    %v377 = vand.u32 %v376, 4294901760
    %378 = vmatpush.msra.mxu0 %v377
    %v379 = vand.u32 %v72, 4294901760
    %v380 = vsub.f32 %v72, %v379
    %v381 = vand.u32 %v380, 4294901760
    %382 = vmatpush.msra.mxu0 %v381
    %v383 = vand.u32 %v68, 4294901760
    %v384 = vsub.f32 %v68, %v383
    %v385 = vand.u32 %v384, 4294901760
    %386 = vmatpush.msra.mxu0 %v385
    %v387 = vand.u32 %v64, 4294901760
    %v388 = vsub.f32 %v64, %v387
    %v389 = vand.u32 %v388, 4294901760
    %390 = vmatpush.msra.mxu0 %v389
    %v391 = vand.u32 %v108, 4294901760
    %392 = vmatmul.f32.gmra.mxu0 %v391
    %v393 = vpop.f32.mrf.mxu0
    %v394 = vadd.f32 %v331, %v393
    %v395 = vand.u32 %v111, 4294901760
    %396 = vmatmul.f32.gmra.mxu0 %v395
    %v397 = vpop.f32.mrf.mxu0
    %v398 = vadd.f32 %v337, %v397
    %v399 = vand.u32 %v114, 4294901760
    %400 = vmatmul.f32.gmra.mxu0 %v399
    %v401 = vpop.f32.mrf.mxu0
    %v402 = vadd.f32 %v343, %v401
    %v403 = vand.u32 %v117, 4294901760
    %404 = vmatmul.f32.gmra.mxu0 %v403
    %v405 = vpop.f32.mrf.mxu0
    %v406 = vadd.f32 %v349, %v405
    %407 = vdwg.mxu0
    %408 = vmatpush.msra.mxu0 0.0
    %409 = vmatpush.msra.mxu0 0.0
    %410 = vmatpush.msra.mxu0 0.0
    %411 = vmatpush.msra.mxu0 0.0
    %412 = vmatpush.msra.mxu0 0.0
    %413 = vmatpush.msra.mxu0 0.0
    %414 = vmatpush.msra.mxu0 0.0
    %415 = vmatpush.msra.mxu0 0.0
    %v416 = vand.u32 %v92, 4294901760
    %417 = vmatpush.msra.mxu0 %v416
    %v418 = vand.u32 %v88, 4294901760
    %419 = vmatpush.msra.mxu0 %v418
    %v420 = vand.u32 %v84, 4294901760
    %421 = vmatpush.msra.mxu0 %v420
    %v422 = vand.u32 %v80, 4294901760
    %423 = vmatpush.msra.mxu0 %v422
    %v424 = vand.u32 %v76, 4294901760
    %425 = vmatpush.msra.mxu0 %v424
    %v426 = vand.u32 %v72, 4294901760
    %427 = vmatpush.msra.mxu0 %v426
    %v428 = vand.u32 %v68, 4294901760
    %429 = vmatpush.msra.mxu0 %v428
    %v430 = vand.u32 %v64, 4294901760
    %431 = vmatpush.msra.mxu0 %v430
    %v432 = vand.u32 %v108, 4294901760
    %433 = vmatmul.f32.gmra.mxu0 %v432
    %v434 = vpop.f32.mrf.mxu0
    %v435 = vadd.f32 %v394, %v434
    %v436 = vand.u32 %v111, 4294901760
    %437 = vmatmul.f32.gmra.mxu0 %v436
    %v438 = vpop.f32.mrf.mxu0
    %v439 = vadd.f32 %v398, %v438
    %v440 = vand.u32 %v114, 4294901760
    %441 = vmatmul.f32.gmra.mxu0 %v440
    %v442 = vpop.f32.mrf.mxu0
    %v443 = vadd.f32 %v402, %v442
    %v444 = vand.u32 %v117, 4294901760
    %445 = vmatmul.f32.gmra.mxu0 %v444
    %v446 = vpop.f32.mrf.mxu0
    %v447 = vadd.f32 %v406, %v446
    %448 = vdwg.mxu0
    %449 = vmatpush.msra.mxu0 0.0
    %450 = vmatpush.msra.mxu0 0.0
    %451 = vmatpush.msra.mxu0 0.0
    %452 = vmatpush.msra.mxu0 0.0
    %453 = vmatpush.msra.mxu0 0.0
    %454 = vmatpush.msra.mxu0 0.0
    %455 = vmatpush.msra.mxu0 0.0
    %456 = vmatpush.msra.mxu0 0.0
    %v457 = vand.u32 %v93, 4294901760
    %458 = vmatpush.msra.mxu0 %v457
    %v459 = vand.u32 %v89, 4294901760
    %460 = vmatpush.msra.mxu0 %v459
    %v461 = vand.u32 %v85, 4294901760
    %462 = vmatpush.msra.mxu0 %v461
    %v463 = vand.u32 %v81, 4294901760
    %464 = vmatpush.msra.mxu0 %v463
    %v465 = vand.u32 %v77, 4294901760
    %466 = vmatpush.msra.mxu0 %v465
    %v467 = vand.u32 %v73, 4294901760
    %468 = vmatpush.msra.mxu0 %v467
    %v469 = vand.u32 %v69, 4294901760
    %470 = vmatpush.msra.mxu0 %v469
    %v471 = vand.u32 %v65, 4294901760
    %472 = vmatpush.msra.mxu0 %v471
    %v473 = vand.u32 %v108, 4294901760
    %v474 = vsub.f32 %v108, %v473
    %v475 = vand.u32 %v474, 4294901760
    %v476 = vsub.f32 %v474, %v475
    %v477 = vand.u32 %v476, 4294901760
    %478 = vmatmul.f32.gmra.mxu0 %v477
    %v479 = vpop.f32.mrf.mxu0
    %v480 = vadd.f32 %v99, %v479
    %v481 = vand.u32 %v111, 4294901760
    %v482 = vsub.f32 %v111, %v481
    %v483 = vand.u32 %v482, 4294901760
    %v484 = vsub.f32 %v482, %v483
    %v485 = vand.u32 %v484, 4294901760
    %486 = vmatmul.f32.gmra.mxu0 %v485
    %v487 = vpop.f32.mrf.mxu0
    %v488 = vadd.f32 %v99, %v487
    %v489 = vand.u32 %v114, 4294901760
    %v490 = vsub.f32 %v114, %v489
    %v491 = vand.u32 %v490, 4294901760
    %v492 = vsub.f32 %v490, %v491
    %v493 = vand.u32 %v492, 4294901760
    %494 = vmatmul.f32.gmra.mxu0 %v493
    %v495 = vpop.f32.mrf.mxu0
    %v496 = vadd.f32 %v99, %v495
    %v497 = vand.u32 %v117, 4294901760
    %v498 = vsub.f32 %v117, %v497
    %v499 = vand.u32 %v498, 4294901760
    %v500 = vsub.f32 %v498, %v499
    %v501 = vand.u32 %v500, 4294901760
    %502 = vmatmul.f32.gmra.mxu0 %v501
    %v503 = vpop.f32.mrf.mxu0
    %v504 = vadd.f32 %v99, %v503
    %505 = vdwg.mxu0
    %506 = vmatpush.msra.mxu0 0.0
    %507 = vmatpush.msra.mxu0 0.0
    %508 = vmatpush.msra.mxu0 0.0
    %509 = vmatpush.msra.mxu0 0.0
    %510 = vmatpush.msra.mxu0 0.0
    %511 = vmatpush.msra.mxu0 0.0
    %512 = vmatpush.msra.mxu0 0.0
    %513 = vmatpush.msra.mxu0 0.0
    %v514 = vand.u32 %v93, 4294901760
    %v515 = vsub.f32 %v93, %v514
    %v516 = vand.u32 %v515, 4294901760
    %v517 = vsub.f32 %v515, %v516
    %v518 = vand.u32 %v517, 4294901760
    %519 = vmatpush.msra.mxu0 %v518
    %v520 = vand.u32 %v89, 4294901760
    %v521 = vsub.f32 %v89, %v520
    %v522 = vand.u32 %v521, 4294901760
    %v523 = vsub.f32 %v521, %v522
    %v524 = vand.u32 %v523, 4294901760
    %525 = vmatpush.msra.mxu0 %v524
    %v526 = vand.u32 %v85, 4294901760
    %v527 = vsub.f32 %v85, %v526
    %v528 = vand.u32 %v527, 4294901760
    %v529 = vsub.f32 %v527, %v528
    %v530 = vand.u32 %v529, 4294901760
    %531 = vmatpush.msra.mxu0 %v530
    %v532 = vand.u32 %v81, 4294901760
    %v533 = vsub.f32 %v81, %v532
    %v534 = vand.u32 %v533, 4294901760
    %v535 = vsub.f32 %v533, %v534
    %v536 = vand.u32 %v535, 4294901760
    %537 = vmatpush.msra.mxu0 %v536
    %v538 = vand.u32 %v77, 4294901760
    %v539 = vsub.f32 %v77, %v538
    %v540 = vand.u32 %v539, 4294901760
    %v541 = vsub.f32 %v539, %v540
    %v542 = vand.u32 %v541, 4294901760
    %543 = vmatpush.msra.mxu0 %v542
    %v544 = vand.u32 %v73, 4294901760
    %v545 = vsub.f32 %v73, %v544
    %v546 = vand.u32 %v545, 4294901760
    %v547 = vsub.f32 %v545, %v546
    %v548 = vand.u32 %v547, 4294901760
    %549 = vmatpush.msra.mxu0 %v548
    %v550 = vand.u32 %v69, 4294901760
    %v551 = vsub.f32 %v69, %v550
    %v552 = vand.u32 %v551, 4294901760
    %v553 = vsub.f32 %v551, %v552
    %v554 = vand.u32 %v553, 4294901760
    %555 = vmatpush.msra.mxu0 %v554
    %v556 = vand.u32 %v65, 4294901760
    %v557 = vsub.f32 %v65, %v556
    %v558 = vand.u32 %v557, 4294901760
    %v559 = vsub.f32 %v557, %v558
    %v560 = vand.u32 %v559, 4294901760
    %561 = vmatpush.msra.mxu0 %v560
    %v562 = vand.u32 %v108, 4294901760
    %563 = vmatmul.f32.gmra.mxu0 %v562
    %v564 = vpop.f32.mrf.mxu0
    %v565 = vadd.f32 %v480, %v564
    %v566 = vand.u32 %v111, 4294901760
    %567 = vmatmul.f32.gmra.mxu0 %v566
    %v568 = vpop.f32.mrf.mxu0
    %v569 = vadd.f32 %v488, %v568
    %v570 = vand.u32 %v114, 4294901760
    %571 = vmatmul.f32.gmra.mxu0 %v570
    %v572 = vpop.f32.mrf.mxu0
    %v573 = vadd.f32 %v496, %v572
    %v574 = vand.u32 %v117, 4294901760
    %575 = vmatmul.f32.gmra.mxu0 %v574
    %v576 = vpop.f32.mrf.mxu0
    %v577 = vadd.f32 %v504, %v576
    %578 = vdwg.mxu0
    %579 = vmatpush.msra.mxu0 0.0
    %580 = vmatpush.msra.mxu0 0.0
    %581 = vmatpush.msra.mxu0 0.0
    %582 = vmatpush.msra.mxu0 0.0
    %583 = vmatpush.msra.mxu0 0.0
    %584 = vmatpush.msra.mxu0 0.0
    %585 = vmatpush.msra.mxu0 0.0
    %586 = vmatpush.msra.mxu0 0.0
    %v587 = vand.u32 %v93, 4294901760
    %v588 = vsub.f32 %v93, %v587
    %589 = vmatpush.msra.mxu0 %v588
    %v590 = vand.u32 %v89, 4294901760
    %v591 = vsub.f32 %v89, %v590
    %592 = vmatpush.msra.mxu0 %v591
    %v593 = vand.u32 %v85, 4294901760
    %v594 = vsub.f32 %v85, %v593
    %595 = vmatpush.msra.mxu0 %v594
    %v596 = vand.u32 %v81, 4294901760
    %v597 = vsub.f32 %v81, %v596
    %598 = vmatpush.msra.mxu0 %v597
    %v599 = vand.u32 %v77, 4294901760
    %v600 = vsub.f32 %v77, %v599
    %601 = vmatpush.msra.mxu0 %v600
    %v602 = vand.u32 %v73, 4294901760
    %v603 = vsub.f32 %v73, %v602
    %604 = vmatpush.msra.mxu0 %v603
    %v605 = vand.u32 %v69, 4294901760
    %v606 = vsub.f32 %v69, %v605
    %607 = vmatpush.msra.mxu0 %v606
    %v608 = vand.u32 %v65, 4294901760
    %v609 = vsub.f32 %v65, %v608
    %610 = vmatpush.msra.mxu0 %v609
    %v611 = vand.u32 %v108, 4294901760
    %v612 = vsub.f32 %v108, %v611
    %613 = vmatmul.f32.gmra.mxu0 %v612
    %v614 = vpop.f32.mrf.mxu0
    %v615 = vadd.f32 %v565, %v614
    %v616 = vand.u32 %v111, 4294901760
    %v617 = vsub.f32 %v111, %v616
    %618 = vmatmul.f32.gmra.mxu0 %v617
    %v619 = vpop.f32.mrf.mxu0
    %v620 = vadd.f32 %v569, %v619
    %v621 = vand.u32 %v114, 4294901760
    %v622 = vsub.f32 %v114, %v621
    %623 = vmatmul.f32.gmra.mxu0 %v622
    %v624 = vpop.f32.mrf.mxu0
    %v625 = vadd.f32 %v573, %v624
    %v626 = vand.u32 %v117, 4294901760
    %v627 = vsub.f32 %v117, %v626
    %628 = vmatmul.f32.gmra.mxu0 %v627
    %v629 = vpop.f32.mrf.mxu0
    %v630 = vadd.f32 %v577, %v629
    %631 = vdwg.mxu0
    %632 = vmatpush.msra.mxu0 0.0
    %633 = vmatpush.msra.mxu0 0.0
    %634 = vmatpush.msra.mxu0 0.0
    %635 = vmatpush.msra.mxu0 0.0
    %636 = vmatpush.msra.mxu0 0.0
    %637 = vmatpush.msra.mxu0 0.0
    %638 = vmatpush.msra.mxu0 0.0
    %639 = vmatpush.msra.mxu0 0.0
    %v640 = vand.u32 %v93, 4294901760
    %641 = vmatpush.msra.mxu0 %v640
    %v642 = vand.u32 %v89, 4294901760
    %643 = vmatpush.msra.mxu0 %v642
    %v644 = vand.u32 %v85, 4294901760
    %645 = vmatpush.msra.mxu0 %v644
    %v646 = vand.u32 %v81, 4294901760
    %647 = vmatpush.msra.mxu0 %v646
    %v648 = vand.u32 %v77, 4294901760
    %649 = vmatpush.msra.mxu0 %v648
    %v650 = vand.u32 %v73, 4294901760
    %651 = vmatpush.msra.mxu0 %v650
    %v652 = vand.u32 %v69, 4294901760
    %653 = vmatpush.msra.mxu0 %v652
    %v654 = vand.u32 %v65, 4294901760
    %655 = vmatpush.msra.mxu0 %v654
    %v656 = vand.u32 %v108, 4294901760
    %v657 = vsub.f32 %v108, %v656
    %v658 = vand.u32 %v657, 4294901760
    %659 = vmatmul.f32.gmra.mxu0 %v658
    %v660 = vpop.f32.mrf.mxu0
    %v661 = vadd.f32 %v615, %v660
    %v662 = vand.u32 %v111, 4294901760
    %v663 = vsub.f32 %v111, %v662
    %v664 = vand.u32 %v663, 4294901760
    %665 = vmatmul.f32.gmra.mxu0 %v664
    %v666 = vpop.f32.mrf.mxu0
    %v667 = vadd.f32 %v620, %v666
    %v668 = vand.u32 %v114, 4294901760
    %v669 = vsub.f32 %v114, %v668
    %v670 = vand.u32 %v669, 4294901760
    %671 = vmatmul.f32.gmra.mxu0 %v670
    %v672 = vpop.f32.mrf.mxu0
    %v673 = vadd.f32 %v625, %v672
    %v674 = vand.u32 %v117, 4294901760
    %v675 = vsub.f32 %v117, %v674
    %v676 = vand.u32 %v675, 4294901760
    %677 = vmatmul.f32.gmra.mxu0 %v676
    %v678 = vpop.f32.mrf.mxu0
    %v679 = vadd.f32 %v630, %v678
    %680 = vdwg.mxu0
    %681 = vmatpush.msra.mxu0 0.0
    %682 = vmatpush.msra.mxu0 0.0
    %683 = vmatpush.msra.mxu0 0.0
    %684 = vmatpush.msra.mxu0 0.0
    %685 = vmatpush.msra.mxu0 0.0
    %686 = vmatpush.msra.mxu0 0.0
    %687 = vmatpush.msra.mxu0 0.0
    %688 = vmatpush.msra.mxu0 0.0
    %v689 = vand.u32 %v93, 4294901760
    %v690 = vsub.f32 %v93, %v689
    %v691 = vand.u32 %v690, 4294901760
    %692 = vmatpush.msra.mxu0 %v691
    %v693 = vand.u32 %v89, 4294901760
    %v694 = vsub.f32 %v89, %v693
    %v695 = vand.u32 %v694, 4294901760
    %696 = vmatpush.msra.mxu0 %v695
    %v697 = vand.u32 %v85, 4294901760
    %v698 = vsub.f32 %v85, %v697
    %v699 = vand.u32 %v698, 4294901760
    %700 = vmatpush.msra.mxu0 %v699
    %v701 = vand.u32 %v81, 4294901760
    %v702 = vsub.f32 %v81, %v701
    %v703 = vand.u32 %v702, 4294901760
    %704 = vmatpush.msra.mxu0 %v703
    %v705 = vand.u32 %v77, 4294901760
    %v706 = vsub.f32 %v77, %v705
    %v707 = vand.u32 %v706, 4294901760
    %708 = vmatpush.msra.mxu0 %v707
    %v709 = vand.u32 %v73, 4294901760
    %v710 = vsub.f32 %v73, %v709
    %v711 = vand.u32 %v710, 4294901760
    %712 = vmatpush.msra.mxu0 %v711
    %v713 = vand.u32 %v69, 4294901760
    %v714 = vsub.f32 %v69, %v713
    %v715 = vand.u32 %v714, 4294901760
    %716 = vmatpush.msra.mxu0 %v715
    %v717 = vand.u32 %v65, 4294901760
    %v718 = vsub.f32 %v65, %v717
    %v719 = vand.u32 %v718, 4294901760
    %720 = vmatpush.msra.mxu0 %v719
    %v721 = vand.u32 %v108, 4294901760
    %722 = vmatmul.f32.gmra.mxu0 %v721
    %v723 = vpop.f32.mrf.mxu0
    %v724 = vadd.f32 %v661, %v723
    %v725 = vand.u32 %v111, 4294901760
    %726 = vmatmul.f32.gmra.mxu0 %v725
    %v727 = vpop.f32.mrf.mxu0
    %v728 = vadd.f32 %v667, %v727
    %v729 = vand.u32 %v114, 4294901760
    %730 = vmatmul.f32.gmra.mxu0 %v729
    %v731 = vpop.f32.mrf.mxu0
    %v732 = vadd.f32 %v673, %v731
    %v733 = vand.u32 %v117, 4294901760
    %734 = vmatmul.f32.gmra.mxu0 %v733
    %v735 = vpop.f32.mrf.mxu0
    %v736 = vadd.f32 %v679, %v735
    %737 = vdwg.mxu0
    %738 = vmatpush.msra.mxu0 0.0
    %739 = vmatpush.msra.mxu0 0.0
    %740 = vmatpush.msra.mxu0 0.0
    %741 = vmatpush.msra.mxu0 0.0
    %742 = vmatpush.msra.mxu0 0.0
    %743 = vmatpush.msra.mxu0 0.0
    %744 = vmatpush.msra.mxu0 0.0
    %745 = vmatpush.msra.mxu0 0.0
    %v746 = vand.u32 %v93, 4294901760
    %747 = vmatpush.msra.mxu0 %v746
    %v748 = vand.u32 %v89, 4294901760
    %749 = vmatpush.msra.mxu0 %v748
    %v750 = vand.u32 %v85, 4294901760
    %751 = vmatpush.msra.mxu0 %v750
    %v752 = vand.u32 %v81, 4294901760
    %753 = vmatpush.msra.mxu0 %v752
    %v754 = vand.u32 %v77, 4294901760
    %755 = vmatpush.msra.mxu0 %v754
    %v756 = vand.u32 %v73, 4294901760
    %757 = vmatpush.msra.mxu0 %v756
    %v758 = vand.u32 %v69, 4294901760
    %759 = vmatpush.msra.mxu0 %v758
    %v760 = vand.u32 %v65, 4294901760
    %761 = vmatpush.msra.mxu0 %v760
    %v762 = vand.u32 %v108, 4294901760
    %763 = vmatmul.f32.gmra.mxu0 %v762
    %v764 = vpop.f32.mrf.mxu0
    %v765 = vadd.f32 %v724, %v764
    %v766 = vand.u32 %v111, 4294901760
    %767 = vmatmul.f32.gmra.mxu0 %v766
    %v768 = vpop.f32.mrf.mxu0
    %v769 = vadd.f32 %v728, %v768
    %v770 = vand.u32 %v114, 4294901760
    %771 = vmatmul.f32.gmra.mxu0 %v770
    %v772 = vpop.f32.mrf.mxu0
    %v773 = vadd.f32 %v732, %v772
    %v774 = vand.u32 %v117, 4294901760
    %775 = vmatmul.f32.gmra.mxu0 %v774
    %v776 = vpop.f32.mrf.mxu0
    %v777 = vadd.f32 %v736, %v776
    %778 = vdwg.mxu0
    %779 = vmatpush.msra.mxu0 0.0
    %780 = vmatpush.msra.mxu0 0.0
    %781 = vmatpush.msra.mxu0 0.0
    %782 = vmatpush.msra.mxu0 0.0
    %783 = vmatpush.msra.mxu0 0.0
    %784 = vmatpush.msra.mxu0 0.0
    %785 = vmatpush.msra.mxu0 0.0
    %786 = vmatpush.msra.mxu0 0.0
    %v787 = vand.u32 %v94, 4294901760
    %788 = vmatpush.msra.mxu0 %v787
    %v789 = vand.u32 %v90, 4294901760
    %790 = vmatpush.msra.mxu0 %v789
    %v791 = vand.u32 %v86, 4294901760
    %792 = vmatpush.msra.mxu0 %v791
    %v793 = vand.u32 %v82, 4294901760
    %794 = vmatpush.msra.mxu0 %v793
    %v795 = vand.u32 %v78, 4294901760
    %796 = vmatpush.msra.mxu0 %v795
    %v797 = vand.u32 %v74, 4294901760
    %798 = vmatpush.msra.mxu0 %v797
    %v799 = vand.u32 %v70, 4294901760
    %800 = vmatpush.msra.mxu0 %v799
    %v801 = vand.u32 %v66, 4294901760
    %802 = vmatpush.msra.mxu0 %v801
    %v803 = vand.u32 %v108, 4294901760
    %v804 = vsub.f32 %v108, %v803
    %v805 = vand.u32 %v804, 4294901760
    %v806 = vsub.f32 %v804, %v805
    %v807 = vand.u32 %v806, 4294901760
    %808 = vmatmul.f32.gmra.mxu0 %v807
    %v809 = vpop.f32.mrf.mxu0
    %v810 = vadd.f32 %v100, %v809
    %v811 = vand.u32 %v111, 4294901760
    %v812 = vsub.f32 %v111, %v811
    %v813 = vand.u32 %v812, 4294901760
    %v814 = vsub.f32 %v812, %v813
    %v815 = vand.u32 %v814, 4294901760
    %816 = vmatmul.f32.gmra.mxu0 %v815
    %v817 = vpop.f32.mrf.mxu0
    %v818 = vadd.f32 %v100, %v817
    %v819 = vand.u32 %v114, 4294901760
    %v820 = vsub.f32 %v114, %v819
    %v821 = vand.u32 %v820, 4294901760
    %v822 = vsub.f32 %v820, %v821
    %v823 = vand.u32 %v822, 4294901760
    %824 = vmatmul.f32.gmra.mxu0 %v823
    %v825 = vpop.f32.mrf.mxu0
    %v826 = vadd.f32 %v100, %v825
    %v827 = vand.u32 %v117, 4294901760
    %v828 = vsub.f32 %v117, %v827
    %v829 = vand.u32 %v828, 4294901760
    %v830 = vsub.f32 %v828, %v829
    %v831 = vand.u32 %v830, 4294901760
    %832 = vmatmul.f32.gmra.mxu0 %v831
    %v833 = vpop.f32.mrf.mxu0
    %v834 = vadd.f32 %v100, %v833
    %835 = vdwg.mxu0
    %836 = vmatpush.msra.mxu0 0.0
    %837 = vmatpush.msra.mxu0 0.0
    %838 = vmatpush.msra.mxu0 0.0
    %839 = vmatpush.msra.mxu0 0.0
    %840 = vmatpush.msra.mxu0 0.0
    %841 = vmatpush.msra.mxu0 0.0
    %842 = vmatpush.msra.mxu0 0.0
    %843 = vmatpush.msra.mxu0 0.0
    %v844 = vand.u32 %v94, 4294901760
    %v845 = vsub.f32 %v94, %v844
    %v846 = vand.u32 %v845, 4294901760
    %v847 = vsub.f32 %v845, %v846
    %v848 = vand.u32 %v847, 4294901760
    %849 = vmatpush.msra.mxu0 %v848
    %v850 = vand.u32 %v90, 4294901760
    %v851 = vsub.f32 %v90, %v850
    %v852 = vand.u32 %v851, 4294901760
    %v853 = vsub.f32 %v851, %v852
    %v854 = vand.u32 %v853, 4294901760
    %855 = vmatpush.msra.mxu0 %v854
    %v856 = vand.u32 %v86, 4294901760
    %v857 = vsub.f32 %v86, %v856
    %v858 = vand.u32 %v857, 4294901760
    %v859 = vsub.f32 %v857, %v858
    %v860 = vand.u32 %v859, 4294901760
    %861 = vmatpush.msra.mxu0 %v860
    %v862 = vand.u32 %v82, 4294901760
    %v863 = vsub.f32 %v82, %v862
    %v864 = vand.u32 %v863, 4294901760
    %v865 = vsub.f32 %v863, %v864
    %v866 = vand.u32 %v865, 4294901760
    %867 = vmatpush.msra.mxu0 %v866
    %v868 = vand.u32 %v78, 4294901760
    %v869 = vsub.f32 %v78, %v868
    %v870 = vand.u32 %v869, 4294901760
    %v871 = vsub.f32 %v869, %v870
    %v872 = vand.u32 %v871, 4294901760
    %873 = vmatpush.msra.mxu0 %v872
    %v874 = vand.u32 %v74, 4294901760
    %v875 = vsub.f32 %v74, %v874
    %v876 = vand.u32 %v875, 4294901760
    %v877 = vsub.f32 %v875, %v876
    %v878 = vand.u32 %v877, 4294901760
    %879 = vmatpush.msra.mxu0 %v878
    %v880 = vand.u32 %v70, 4294901760
    %v881 = vsub.f32 %v70, %v880
    %v882 = vand.u32 %v881, 4294901760
    %v883 = vsub.f32 %v881, %v882
    %v884 = vand.u32 %v883, 4294901760
    %885 = vmatpush.msra.mxu0 %v884
    %v886 = vand.u32 %v66, 4294901760
    %v887 = vsub.f32 %v66, %v886
    %v888 = vand.u32 %v887, 4294901760
    %v889 = vsub.f32 %v887, %v888
    %v890 = vand.u32 %v889, 4294901760
    %891 = vmatpush.msra.mxu0 %v890
    %v892 = vand.u32 %v108, 4294901760
    %893 = vmatmul.f32.gmra.mxu0 %v892
    %v894 = vpop.f32.mrf.mxu0
    %v895 = vadd.f32 %v810, %v894
    %v896 = vand.u32 %v111, 4294901760
    %897 = vmatmul.f32.gmra.mxu0 %v896
    %v898 = vpop.f32.mrf.mxu0
    %v899 = vadd.f32 %v818, %v898
    %v900 = vand.u32 %v114, 4294901760
    %901 = vmatmul.f32.gmra.mxu0 %v900
    %v902 = vpop.f32.mrf.mxu0
    %v903 = vadd.f32 %v826, %v902
    %v904 = vand.u32 %v117, 4294901760
    %905 = vmatmul.f32.gmra.mxu0 %v904
    %v906 = vpop.f32.mrf.mxu0
    %v907 = vadd.f32 %v834, %v906
    %908 = vdwg.mxu0
    %909 = vmatpush.msra.mxu0 0.0
    %910 = vmatpush.msra.mxu0 0.0
    %911 = vmatpush.msra.mxu0 0.0
    %912 = vmatpush.msra.mxu0 0.0
    %913 = vmatpush.msra.mxu0 0.0
    %914 = vmatpush.msra.mxu0 0.0
    %915 = vmatpush.msra.mxu0 0.0
    %916 = vmatpush.msra.mxu0 0.0
    %v917 = vand.u32 %v94, 4294901760
    %v918 = vsub.f32 %v94, %v917
    %919 = vmatpush.msra.mxu0 %v918
    %v920 = vand.u32 %v90, 4294901760
    %v921 = vsub.f32 %v90, %v920
    %922 = vmatpush.msra.mxu0 %v921
    %v923 = vand.u32 %v86, 4294901760
    %v924 = vsub.f32 %v86, %v923
    %925 = vmatpush.msra.mxu0 %v924
    %v926 = vand.u32 %v82, 4294901760
    %v927 = vsub.f32 %v82, %v926
    %928 = vmatpush.msra.mxu0 %v927
    %v929 = vand.u32 %v78, 4294901760
    %v930 = vsub.f32 %v78, %v929
    %931 = vmatpush.msra.mxu0 %v930
    %v932 = vand.u32 %v74, 4294901760
    %v933 = vsub.f32 %v74, %v932
    %934 = vmatpush.msra.mxu0 %v933
    %v935 = vand.u32 %v70, 4294901760
    %v936 = vsub.f32 %v70, %v935
    %937 = vmatpush.msra.mxu0 %v936
    %v938 = vand.u32 %v66, 4294901760
    %v939 = vsub.f32 %v66, %v938
    %940 = vmatpush.msra.mxu0 %v939
    %v941 = vand.u32 %v108, 4294901760
    %v942 = vsub.f32 %v108, %v941
    %943 = vmatmul.f32.gmra.mxu0 %v942
    %v944 = vpop.f32.mrf.mxu0
    %v945 = vadd.f32 %v895, %v944
    %v946 = vand.u32 %v111, 4294901760
    %v947 = vsub.f32 %v111, %v946
    %948 = vmatmul.f32.gmra.mxu0 %v947
    %v949 = vpop.f32.mrf.mxu0
    %v950 = vadd.f32 %v899, %v949
    %v951 = vand.u32 %v114, 4294901760
    %v952 = vsub.f32 %v114, %v951
    %953 = vmatmul.f32.gmra.mxu0 %v952
    %v954 = vpop.f32.mrf.mxu0
    %v955 = vadd.f32 %v903, %v954
    %v956 = vand.u32 %v117, 4294901760
    %v957 = vsub.f32 %v117, %v956
    %958 = vmatmul.f32.gmra.mxu0 %v957
    %v959 = vpop.f32.mrf.mxu0
    %v960 = vadd.f32 %v907, %v959
    %961 = vdwg.mxu0
    %962 = vmatpush.msra.mxu0 0.0
    %963 = vmatpush.msra.mxu0 0.0
    %964 = vmatpush.msra.mxu0 0.0
    %965 = vmatpush.msra.mxu0 0.0
    %966 = vmatpush.msra.mxu0 0.0
    %967 = vmatpush.msra.mxu0 0.0
    %968 = vmatpush.msra.mxu0 0.0
    %969 = vmatpush.msra.mxu0 0.0
    %v970 = vand.u32 %v94, 4294901760
    %971 = vmatpush.msra.mxu0 %v970
    %v972 = vand.u32 %v90, 4294901760
    %973 = vmatpush.msra.mxu0 %v972
    %v974 = vand.u32 %v86, 4294901760
    %975 = vmatpush.msra.mxu0 %v974
    %v976 = vand.u32 %v82, 4294901760
    %977 = vmatpush.msra.mxu0 %v976
    %v978 = vand.u32 %v78, 4294901760
    %979 = vmatpush.msra.mxu0 %v978
    %v980 = vand.u32 %v74, 4294901760
    %981 = vmatpush.msra.mxu0 %v980
    %v982 = vand.u32 %v70, 4294901760
    %983 = vmatpush.msra.mxu0 %v982
    %v984 = vand.u32 %v66, 4294901760
    %985 = vmatpush.msra.mxu0 %v984
    %v986 = vand.u32 %v108, 4294901760
    %v987 = vsub.f32 %v108, %v986
    %v988 = vand.u32 %v987, 4294901760
    %989 = vmatmul.f32.gmra.mxu0 %v988
    %v990 = vpop.f32.mrf.mxu0
    %v991 = vadd.f32 %v945, %v990
    %v992 = vand.u32 %v111, 4294901760
    %v993 = vsub.f32 %v111, %v992
    %v994 = vand.u32 %v993, 4294901760
    %995 = vmatmul.f32.gmra.mxu0 %v994
    %v996 = vpop.f32.mrf.mxu0
    %v997 = vadd.f32 %v950, %v996
    %v998 = vand.u32 %v114, 4294901760
    %v999 = vsub.f32 %v114, %v998
    %v1000 = vand.u32 %v999, 4294901760
    %1001 = vmatmul.f32.gmra.mxu0 %v1000
    %v1002 = vpop.f32.mrf.mxu0
    %v1003 = vadd.f32 %v955, %v1002
    %v1004 = vand.u32 %v117, 4294901760
    %v1005 = vsub.f32 %v117, %v1004
    %v1006 = vand.u32 %v1005, 4294901760
    %1007 = vmatmul.f32.gmra.mxu0 %v1006
    %v1008 = vpop.f32.mrf.mxu0
    %v1009 = vadd.f32 %v960, %v1008
    %1010 = vdwg.mxu0
    %1011 = vmatpush.msra.mxu0 0.0
    %1012 = vmatpush.msra.mxu0 0.0
    %1013 = vmatpush.msra.mxu0 0.0
    %1014 = vmatpush.msra.mxu0 0.0
    %1015 = vmatpush.msra.mxu0 0.0
    %1016 = vmatpush.msra.mxu0 0.0
    %1017 = vmatpush.msra.mxu0 0.0
    %1018 = vmatpush.msra.mxu0 0.0
    %v1019 = vand.u32 %v94, 4294901760
    %v1020 = vsub.f32 %v94, %v1019
    %v1021 = vand.u32 %v1020, 4294901760
    %1022 = vmatpush.msra.mxu0 %v1021
    %v1023 = vand.u32 %v90, 4294901760
    %v1024 = vsub.f32 %v90, %v1023
    %v1025 = vand.u32 %v1024, 4294901760
    %1026 = vmatpush.msra.mxu0 %v1025
    %v1027 = vand.u32 %v86, 4294901760
    %v1028 = vsub.f32 %v86, %v1027
    %v1029 = vand.u32 %v1028, 4294901760
    %1030 = vmatpush.msra.mxu0 %v1029
    %v1031 = vand.u32 %v82, 4294901760
    %v1032 = vsub.f32 %v82, %v1031
    %v1033 = vand.u32 %v1032, 4294901760
    %1034 = vmatpush.msra.mxu0 %v1033
    %v1035 = vand.u32 %v78, 4294901760
    %v1036 = vsub.f32 %v78, %v1035
    %v1037 = vand.u32 %v1036, 4294901760
    %1038 = vmatpush.msra.mxu0 %v1037
    %v1039 = vand.u32 %v74, 4294901760
    %v1040 = vsub.f32 %v74, %v1039
    %v1041 = vand.u32 %v1040, 4294901760
    %1042 = vmatpush.msra.mxu0 %v1041
    %v1043 = vand.u32 %v70, 4294901760
    %v1044 = vsub.f32 %v70, %v1043
    %v1045 = vand.u32 %v1044, 4294901760
    %1046 = vmatpush.msra.mxu0 %v1045
    %v1047 = vand.u32 %v66, 4294901760
    %v1048 = vsub.f32 %v66, %v1047
    %v1049 = vand.u32 %v1048, 4294901760
    %1050 = vmatpush.msra.mxu0 %v1049
    %v1051 = vand.u32 %v108, 4294901760
    %1052 = vmatmul.f32.gmra.mxu0 %v1051
    %v1053 = vpop.f32.mrf.mxu0
    %v1054 = vadd.f32 %v991, %v1053
    %v1055 = vand.u32 %v111, 4294901760
    %1056 = vmatmul.f32.gmra.mxu0 %v1055
    %v1057 = vpop.f32.mrf.mxu0
    %v1058 = vadd.f32 %v997, %v1057
    %v1059 = vand.u32 %v114, 4294901760
    %1060 = vmatmul.f32.gmra.mxu0 %v1059
    %v1061 = vpop.f32.mrf.mxu0
    %v1062 = vadd.f32 %v1003, %v1061
    %v1063 = vand.u32 %v117, 4294901760
    %1064 = vmatmul.f32.gmra.mxu0 %v1063
    %v1065 = vpop.f32.mrf.mxu0
    %v1066 = vadd.f32 %v1009, %v1065
    %1067 = vdwg.mxu0
    %1068 = vmatpush.msra.mxu0 0.0
    %1069 = vmatpush.msra.mxu0 0.0
    %1070 = vmatpush.msra.mxu0 0.0
    %1071 = vmatpush.msra.mxu0 0.0
    %1072 = vmatpush.msra.mxu0 0.0
    %1073 = vmatpush.msra.mxu0 0.0
    %1074 = vmatpush.msra.mxu0 0.0
    %1075 = vmatpush.msra.mxu0 0.0
    %v1076 = vand.u32 %v94, 4294901760
    %1077 = vmatpush.msra.mxu0 %v1076
    %v1078 = vand.u32 %v90, 4294901760
    %1079 = vmatpush.msra.mxu0 %v1078
    %v1080 = vand.u32 %v86, 4294901760
    %1081 = vmatpush.msra.mxu0 %v1080
    %v1082 = vand.u32 %v82, 4294901760
    %1083 = vmatpush.msra.mxu0 %v1082
    %v1084 = vand.u32 %v78, 4294901760
    %1085 = vmatpush.msra.mxu0 %v1084
    %v1086 = vand.u32 %v74, 4294901760
    %1087 = vmatpush.msra.mxu0 %v1086
    %v1088 = vand.u32 %v70, 4294901760
    %1089 = vmatpush.msra.mxu0 %v1088
    %v1090 = vand.u32 %v66, 4294901760
    %1091 = vmatpush.msra.mxu0 %v1090
    %v1092 = vand.u32 %v108, 4294901760
    %1093 = vmatmul.f32.gmra.mxu0 %v1092
    %v1094 = vpop.f32.mrf.mxu0
    %v1095 = vadd.f32 %v1054, %v1094
    %v1096 = vand.u32 %v111, 4294901760
    %1097 = vmatmul.f32.gmra.mxu0 %v1096
    %v1098 = vpop.f32.mrf.mxu0
    %v1099 = vadd.f32 %v1058, %v1098
    %v1100 = vand.u32 %v114, 4294901760
    %1101 = vmatmul.f32.gmra.mxu0 %v1100
    %v1102 = vpop.f32.mrf.mxu0
    %v1103 = vadd.f32 %v1062, %v1102
    %v1104 = vand.u32 %v117, 4294901760
    %1105 = vmatmul.f32.gmra.mxu0 %v1104
    %v1106 = vpop.f32.mrf.mxu0
    %v1107 = vadd.f32 %v1066, %v1106
    %1108 = vdwg.mxu0
    %1109 = vmatpush.msra.mxu0 0.0
    %1110 = vmatpush.msra.mxu0 0.0
    %1111 = vmatpush.msra.mxu0 0.0
    %1112 = vmatpush.msra.mxu0 0.0
    %1113 = vmatpush.msra.mxu0 0.0
    %1114 = vmatpush.msra.mxu0 0.0
    %1115 = vmatpush.msra.mxu0 0.0
    %1116 = vmatpush.msra.mxu0 0.0
    %v1117 = vand.u32 %v95, 4294901760
    %1118 = vmatpush.msra.mxu0 %v1117
    %v1119 = vand.u32 %v91, 4294901760
    %1120 = vmatpush.msra.mxu0 %v1119
    %v1121 = vand.u32 %v87, 4294901760
    %1122 = vmatpush.msra.mxu0 %v1121
    %v1123 = vand.u32 %v83, 4294901760
    %1124 = vmatpush.msra.mxu0 %v1123
    %v1125 = vand.u32 %v79, 4294901760
    %1126 = vmatpush.msra.mxu0 %v1125
    %v1127 = vand.u32 %v75, 4294901760
    %1128 = vmatpush.msra.mxu0 %v1127
    %v1129 = vand.u32 %v71, 4294901760
    %1130 = vmatpush.msra.mxu0 %v1129
    %v1131 = vand.u32 %v67, 4294901760
    %1132 = vmatpush.msra.mxu0 %v1131
    %v1133 = vand.u32 %v108, 4294901760
    %v1134 = vsub.f32 %v108, %v1133
    %v1135 = vand.u32 %v1134, 4294901760
    %v1136 = vsub.f32 %v1134, %v1135
    %v1137 = vand.u32 %v1136, 4294901760
    %1138 = vmatmul.f32.gmra.mxu0 %v1137
    %v1139 = vpop.f32.mrf.mxu0
    %v1140 = vadd.f32 %v101, %v1139
    %v1141 = vand.u32 %v111, 4294901760
    %v1142 = vsub.f32 %v111, %v1141
    %v1143 = vand.u32 %v1142, 4294901760
    %v1144 = vsub.f32 %v1142, %v1143
    %v1145 = vand.u32 %v1144, 4294901760
    %1146 = vmatmul.f32.gmra.mxu0 %v1145
    %v1147 = vpop.f32.mrf.mxu0
    %v1148 = vadd.f32 %v101, %v1147
    %v1149 = vand.u32 %v114, 4294901760
    %v1150 = vsub.f32 %v114, %v1149
    %v1151 = vand.u32 %v1150, 4294901760
    %v1152 = vsub.f32 %v1150, %v1151
    %v1153 = vand.u32 %v1152, 4294901760
    %1154 = vmatmul.f32.gmra.mxu0 %v1153
    %v1155 = vpop.f32.mrf.mxu0
    %v1156 = vadd.f32 %v101, %v1155
    %v1157 = vand.u32 %v117, 4294901760
    %v1158 = vsub.f32 %v117, %v1157
    %v1159 = vand.u32 %v1158, 4294901760
    %v1160 = vsub.f32 %v1158, %v1159
    %v1161 = vand.u32 %v1160, 4294901760
    %1162 = vmatmul.f32.gmra.mxu0 %v1161
    %v1163 = vpop.f32.mrf.mxu0
    %v1164 = vadd.f32 %v101, %v1163
    %1165 = vdwg.mxu0
    %1166 = vmatpush.msra.mxu0 0.0
    %1167 = vmatpush.msra.mxu0 0.0
    %1168 = vmatpush.msra.mxu0 0.0
    %1169 = vmatpush.msra.mxu0 0.0
    %1170 = vmatpush.msra.mxu0 0.0
    %1171 = vmatpush.msra.mxu0 0.0
    %1172 = vmatpush.msra.mxu0 0.0
    %1173 = vmatpush.msra.mxu0 0.0
    %v1174 = vand.u32 %v95, 4294901760
    %v1175 = vsub.f32 %v95, %v1174
    %v1176 = vand.u32 %v1175, 4294901760
    %v1177 = vsub.f32 %v1175, %v1176
    %v1178 = vand.u32 %v1177, 4294901760
    %1179 = vmatpush.msra.mxu0 %v1178
    %v1180 = vand.u32 %v91, 4294901760
    %v1181 = vsub.f32 %v91, %v1180
    %v1182 = vand.u32 %v1181, 4294901760
    %v1183 = vsub.f32 %v1181, %v1182
    %v1184 = vand.u32 %v1183, 4294901760
    %1185 = vmatpush.msra.mxu0 %v1184
    %v1186 = vand.u32 %v87, 4294901760
    %v1187 = vsub.f32 %v87, %v1186
    %v1188 = vand.u32 %v1187, 4294901760
    %v1189 = vsub.f32 %v1187, %v1188
    %v1190 = vand.u32 %v1189, 4294901760
    %1191 = vmatpush.msra.mxu0 %v1190
    %v1192 = vand.u32 %v83, 4294901760
    %v1193 = vsub.f32 %v83, %v1192
    %v1194 = vand.u32 %v1193, 4294901760
    %v1195 = vsub.f32 %v1193, %v1194
    %v1196 = vand.u32 %v1195, 4294901760
    %1197 = vmatpush.msra.mxu0 %v1196
    %v1198 = vand.u32 %v79, 4294901760
    %v1199 = vsub.f32 %v79, %v1198
    %v1200 = vand.u32 %v1199, 4294901760
    %v1201 = vsub.f32 %v1199, %v1200
    %v1202 = vand.u32 %v1201, 4294901760
    %1203 = vmatpush.msra.mxu0 %v1202
    %v1204 = vand.u32 %v75, 4294901760
    %v1205 = vsub.f32 %v75, %v1204
    %v1206 = vand.u32 %v1205, 4294901760
    %v1207 = vsub.f32 %v1205, %v1206
    %v1208 = vand.u32 %v1207, 4294901760
    %1209 = vmatpush.msra.mxu0 %v1208
    %v1210 = vand.u32 %v71, 4294901760
    %v1211 = vsub.f32 %v71, %v1210
    %v1212 = vand.u32 %v1211, 4294901760
    %v1213 = vsub.f32 %v1211, %v1212
    %v1214 = vand.u32 %v1213, 4294901760
    %1215 = vmatpush.msra.mxu0 %v1214
    %v1216 = vand.u32 %v67, 4294901760
    %v1217 = vsub.f32 %v67, %v1216
    %v1218 = vand.u32 %v1217, 4294901760
    %v1219 = vsub.f32 %v1217, %v1218
    %v1220 = vand.u32 %v1219, 4294901760
    %1221 = vmatpush.msra.mxu0 %v1220
    %v1222 = vand.u32 %v108, 4294901760
    %1223 = vmatmul.f32.gmra.mxu0 %v1222
    %v1224 = vpop.f32.mrf.mxu0
    %v1225 = vadd.f32 %v1140, %v1224
    %v1226 = vand.u32 %v111, 4294901760
    %1227 = vmatmul.f32.gmra.mxu0 %v1226
    %v1228 = vpop.f32.mrf.mxu0
    %v1229 = vadd.f32 %v1148, %v1228
    %v1230 = vand.u32 %v114, 4294901760
    %1231 = vmatmul.f32.gmra.mxu0 %v1230
    %v1232 = vpop.f32.mrf.mxu0
    %v1233 = vadd.f32 %v1156, %v1232
    %v1234 = vand.u32 %v117, 4294901760
    %1235 = vmatmul.f32.gmra.mxu0 %v1234
    %v1236 = vpop.f32.mrf.mxu0
    %v1237 = vadd.f32 %v1164, %v1236
    %1238 = vdwg.mxu0
    %1239 = vmatpush.msra.mxu0 0.0
    %1240 = vmatpush.msra.mxu0 0.0
    %1241 = vmatpush.msra.mxu0 0.0
    %1242 = vmatpush.msra.mxu0 0.0
    %1243 = vmatpush.msra.mxu0 0.0
    %1244 = vmatpush.msra.mxu0 0.0
    %1245 = vmatpush.msra.mxu0 0.0
    %1246 = vmatpush.msra.mxu0 0.0
    %v1247 = vand.u32 %v95, 4294901760
    %v1248 = vsub.f32 %v95, %v1247
    %1249 = vmatpush.msra.mxu0 %v1248
    %v1250 = vand.u32 %v91, 4294901760
    %v1251 = vsub.f32 %v91, %v1250
    %1252 = vmatpush.msra.mxu0 %v1251
    %v1253 = vand.u32 %v87, 4294901760
    %v1254 = vsub.f32 %v87, %v1253
    %1255 = vmatpush.msra.mxu0 %v1254
    %v1256 = vand.u32 %v83, 4294901760
    %v1257 = vsub.f32 %v83, %v1256
    %1258 = vmatpush.msra.mxu0 %v1257
    %v1259 = vand.u32 %v79, 4294901760
    %v1260 = vsub.f32 %v79, %v1259
    %1261 = vmatpush.msra.mxu0 %v1260
    %v1262 = vand.u32 %v75, 4294901760
    %v1263 = vsub.f32 %v75, %v1262
    %1264 = vmatpush.msra.mxu0 %v1263
    %v1265 = vand.u32 %v71, 4294901760
    %v1266 = vsub.f32 %v71, %v1265
    %1267 = vmatpush.msra.mxu0 %v1266
    %v1268 = vand.u32 %v67, 4294901760
    %v1269 = vsub.f32 %v67, %v1268
    %1270 = vmatpush.msra.mxu0 %v1269
    %v1271 = vand.u32 %v108, 4294901760
    %v1272 = vsub.f32 %v108, %v1271
    %1273 = vmatmul.f32.gmra.mxu0 %v1272
    %v1274 = vpop.f32.mrf.mxu0
    %v1275 = vadd.f32 %v1225, %v1274
    %v1276 = vand.u32 %v111, 4294901760
    %v1277 = vsub.f32 %v111, %v1276
    %1278 = vmatmul.f32.gmra.mxu0 %v1277
    %v1279 = vpop.f32.mrf.mxu0
    %v1280 = vadd.f32 %v1229, %v1279
    %v1281 = vand.u32 %v114, 4294901760
    %v1282 = vsub.f32 %v114, %v1281
    %1283 = vmatmul.f32.gmra.mxu0 %v1282
    %v1284 = vpop.f32.mrf.mxu0
    %v1285 = vadd.f32 %v1233, %v1284
    %v1286 = vand.u32 %v117, 4294901760
    %v1287 = vsub.f32 %v117, %v1286
    %1288 = vmatmul.f32.gmra.mxu0 %v1287
    %v1289 = vpop.f32.mrf.mxu0
    %v1290 = vadd.f32 %v1237, %v1289
    %1291 = vdwg.mxu0
    %1292 = vmatpush.msra.mxu0 0.0
    %1293 = vmatpush.msra.mxu0 0.0
    %1294 = vmatpush.msra.mxu0 0.0
    %1295 = vmatpush.msra.mxu0 0.0
    %1296 = vmatpush.msra.mxu0 0.0
    %1297 = vmatpush.msra.mxu0 0.0
    %1298 = vmatpush.msra.mxu0 0.0
    %1299 = vmatpush.msra.mxu0 0.0
    %v1300 = vand.u32 %v95, 4294901760
    %1301 = vmatpush.msra.mxu0 %v1300
    %v1302 = vand.u32 %v91, 4294901760
    %1303 = vmatpush.msra.mxu0 %v1302
    %v1304 = vand.u32 %v87, 4294901760
    %1305 = vmatpush.msra.mxu0 %v1304
    %v1306 = vand.u32 %v83, 4294901760
    %1307 = vmatpush.msra.mxu0 %v1306
    %v1308 = vand.u32 %v79, 4294901760
    %1309 = vmatpush.msra.mxu0 %v1308
    %v1310 = vand.u32 %v75, 4294901760
    %1311 = vmatpush.msra.mxu0 %v1310
    %v1312 = vand.u32 %v71, 4294901760
    %1313 = vmatpush.msra.mxu0 %v1312
    %v1314 = vand.u32 %v67, 4294901760
    %1315 = vmatpush.msra.mxu0 %v1314
    %v1316 = vand.u32 %v108, 4294901760
    %v1317 = vsub.f32 %v108, %v1316
    %v1318 = vand.u32 %v1317, 4294901760
    %1319 = vmatmul.f32.gmra.mxu0 %v1318
    %v1320 = vpop.f32.mrf.mxu0
    %v1321 = vadd.f32 %v1275, %v1320
    %v1322 = vand.u32 %v111, 4294901760
    %v1323 = vsub.f32 %v111, %v1322
    %v1324 = vand.u32 %v1323, 4294901760
    %1325 = vmatmul.f32.gmra.mxu0 %v1324
    %v1326 = vpop.f32.mrf.mxu0
    %v1327 = vadd.f32 %v1280, %v1326
    %v1328 = vand.u32 %v114, 4294901760
    %v1329 = vsub.f32 %v114, %v1328
    %v1330 = vand.u32 %v1329, 4294901760
    %1331 = vmatmul.f32.gmra.mxu0 %v1330
    %v1332 = vpop.f32.mrf.mxu0
    %v1333 = vadd.f32 %v1285, %v1332
    %v1334 = vand.u32 %v117, 4294901760
    %v1335 = vsub.f32 %v117, %v1334
    %v1336 = vand.u32 %v1335, 4294901760
    %1337 = vmatmul.f32.gmra.mxu0 %v1336
    %v1338 = vpop.f32.mrf.mxu0
    %v1339 = vadd.f32 %v1290, %v1338
    %1340 = vdwg.mxu0
    %1341 = vmatpush.msra.mxu0 0.0
    %1342 = vmatpush.msra.mxu0 0.0
    %1343 = vmatpush.msra.mxu0 0.0
    %1344 = vmatpush.msra.mxu0 0.0
    %1345 = vmatpush.msra.mxu0 0.0
    %1346 = vmatpush.msra.mxu0 0.0
    %1347 = vmatpush.msra.mxu0 0.0
    %1348 = vmatpush.msra.mxu0 0.0
    %v1349 = vand.u32 %v95, 4294901760
    %v1350 = vsub.f32 %v95, %v1349
    %v1351 = vand.u32 %v1350, 4294901760
    %1352 = vmatpush.msra.mxu0 %v1351
    %v1353 = vand.u32 %v91, 4294901760
    %v1354 = vsub.f32 %v91, %v1353
    %v1355 = vand.u32 %v1354, 4294901760
    %1356 = vmatpush.msra.mxu0 %v1355
    %v1357 = vand.u32 %v87, 4294901760
    %v1358 = vsub.f32 %v87, %v1357
    %v1359 = vand.u32 %v1358, 4294901760
    %1360 = vmatpush.msra.mxu0 %v1359
    %v1361 = vand.u32 %v83, 4294901760
    %v1362 = vsub.f32 %v83, %v1361
    %v1363 = vand.u32 %v1362, 4294901760
    %1364 = vmatpush.msra.mxu0 %v1363
    %v1365 = vand.u32 %v79, 4294901760
    %v1366 = vsub.f32 %v79, %v1365
    %v1367 = vand.u32 %v1366, 4294901760
    %1368 = vmatpush.msra.mxu0 %v1367
    %v1369 = vand.u32 %v75, 4294901760
    %v1370 = vsub.f32 %v75, %v1369
    %v1371 = vand.u32 %v1370, 4294901760
    %1372 = vmatpush.msra.mxu0 %v1371
    %v1373 = vand.u32 %v71, 4294901760
    %v1374 = vsub.f32 %v71, %v1373
    %v1375 = vand.u32 %v1374, 4294901760
    %1376 = vmatpush.msra.mxu0 %v1375
    %v1377 = vand.u32 %v67, 4294901760
    %v1378 = vsub.f32 %v67, %v1377
    %v1379 = vand.u32 %v1378, 4294901760
    %1380 = vmatpush.msra.mxu0 %v1379
    %v1381 = vand.u32 %v108, 4294901760
    %1382 = vmatmul.f32.gmra.mxu0 %v1381
    %v1383 = vpop.f32.mrf.mxu0
    %v1384 = vadd.f32 %v1321, %v1383
    %v1385 = vand.u32 %v111, 4294901760
    %1386 = vmatmul.f32.gmra.mxu0 %v1385
    %v1387 = vpop.f32.mrf.mxu0
    %v1388 = vadd.f32 %v1327, %v1387
    %v1389 = vand.u32 %v114, 4294901760
    %1390 = vmatmul.f32.gmra.mxu0 %v1389
    %v1391 = vpop.f32.mrf.mxu0
    %v1392 = vadd.f32 %v1333, %v1391
    %v1393 = vand.u32 %v117, 4294901760
    %1394 = vmatmul.f32.gmra.mxu0 %v1393
    %v1395 = vpop.f32.mrf.mxu0
    %v1396 = vadd.f32 %v1339, %v1395
    %1397 = vdwg.mxu0
    %1398 = vmatpush.msra.mxu0 0.0
    %1399 = vmatpush.msra.mxu0 0.0
    %1400 = vmatpush.msra.mxu0 0.0
    %1401 = vmatpush.msra.mxu0 0.0
    %1402 = vmatpush.msra.mxu0 0.0
    %1403 = vmatpush.msra.mxu0 0.0
    %1404 = vmatpush.msra.mxu0 0.0
    %1405 = vmatpush.msra.mxu0 0.0
    %v1406 = vand.u32 %v95, 4294901760
    %1407 = vmatpush.msra.mxu0 %v1406
    %v1408 = vand.u32 %v91, 4294901760
    %1409 = vmatpush.msra.mxu0 %v1408
    %v1410 = vand.u32 %v87, 4294901760
    %1411 = vmatpush.msra.mxu0 %v1410
    %v1412 = vand.u32 %v83, 4294901760
    %1413 = vmatpush.msra.mxu0 %v1412
    %v1414 = vand.u32 %v79, 4294901760
    %1415 = vmatpush.msra.mxu0 %v1414
    %v1416 = vand.u32 %v75, 4294901760
    %1417 = vmatpush.msra.mxu0 %v1416
    %v1418 = vand.u32 %v71, 4294901760
    %1419 = vmatpush.msra.mxu0 %v1418
    %v1420 = vand.u32 %v67, 4294901760
    %1421 = vmatpush.msra.mxu0 %v1420
    %v1422 = vand.u32 %v108, 4294901760
    %1423 = vmatmul.f32.gmra.mxu0 %v1422
    %v1424 = vpop.f32.mrf.mxu0
    %v1425 = vadd.f32 %v1384, %v1424
    %v1426 = vand.u32 %v111, 4294901760
    %1427 = vmatmul.f32.gmra.mxu0 %v1426
    %v1428 = vpop.f32.mrf.mxu0
    %v1429 = vadd.f32 %v1388, %v1428
    %v1430 = vand.u32 %v114, 4294901760
    %1431 = vmatmul.f32.gmra.mxu0 %v1430
    %v1432 = vpop.f32.mrf.mxu0
    %v1433 = vadd.f32 %v1392, %v1432
    %v1434 = vand.u32 %v117, 4294901760
    %1435 = vmatmul.f32.gmra.mxu0 %v1434
    %v1436 = vpop.f32.mrf.mxu0
    %v1437 = vadd.f32 %v1396, %v1436
    %1438 = vdwg.mxu0
    %1439 = vst [vmem:[#allocation8] sm:$0xff] %v435
    %1440 = vst [vmem:[#allocation8 + $0x8] sm:$0xff] %v765
    %1441 = vst [vmem:[#allocation8 + $0x10] sm:$0xff] %v1095
    %1442 = vst [vmem:[#allocation8 + $0x18] sm:$0xff] %v1425
    %1443 = vst [vmem:[#allocation8 + $0x20] sm:$0xff] %v439
    %1444 = vst [vmem:[#allocation8 + $0x28] sm:$0xff] %v769
    %1445 = vst [vmem:[#allocation8 + $0x30] sm:$0xff] %v1099
    %1446 = vst [vmem:[#allocation8 + $0x38] sm:$0xff] %v1429
    %1447 = vst [vmem:[#allocation8 + $0x40] sm:$0xff] %v443
    %1448 = vst [vmem:[#allocation8 + $0x48] sm:$0xff] %v773
    %1449 = vst [vmem:[#allocation8 + $0x50] sm:$0xff] %v1103
    %1450 = vst [vmem:[#allocation8 + $0x58] sm:$0xff] %v1433
    %1451 = vst [vmem:[#allocation8 + $0x60] sm:$0xff] %v447
    %1452 = vst [vmem:[#allocation8 + $0x68] sm:$0xff] %v777
    %1453 = vst [vmem:[#allocation8 + $0x70] sm:$0xff] %v1107
    %1454 = vst [vmem:[#allocation8 + $0x78] sm:$0xff] %v1437
    // Predicated region
    $region26: #{tpu_custom_call.1} parent=1 // pred_check
      _
    $region27: #{tpu_custom_call.1} parent=1 // pred_check_branch
      %1456 = sbr.rel (0) target = $region29
    $region28: #{tpu_custom_call.1} parent=1 // pred_region
      %1458 = vsyncadd [#allocation4], 0
      %s1459 = sshll.u32 [#allocation8], 4
      %s1460 = int_to_ptr.vmem [resolvable:$true] %s1459
      %s1461 = sshll.u32 %s3, 4
      %s1462 = int_to_ptr.hbm [resolvable:$true] %s1461
      %1467 = dma.vmem_to_hbm [thread:$0]  %s1460, 2048, %s1462, [#allocation4], 512, 512, 32
    $region29: #{tpu_custom_call.1} parent=1 // pred_fallthru
      _
    // Predicated region
    $region30: #{tpu_custom_call.1} parent=1 // pred_check
      _
    $region31: #{tpu_custom_call.1} parent=1 // pred_check_branch
      %1469 = sbr.rel (0) target = $region33
    $region32: #{tpu_custom_call.1} parent=1 // pred_region
      %1471 = dma.done [#allocation4], 2048
    $region33: #{tpu_custom_call.1} parent=1 // pred_fallthru
      _
    %1472 = vsyncpa [#allocation3], 1
    %1473 = vsyncpa [#allocation6], 1
    %1474 = vsyncpa [#allocation4], 1

</llo_original>
